<compile_context>
chip_gen: v7x
topology: tpu7x:2x2x1
jax: 0.10.0
libtpu: 0.0.40
codegen_flags: <defaults>
</compile_context>

<pallas_src>
import jax
import jax.numpy as jnp
from jax import lax
from jax.experimental import pallas as pl
from jax.experimental.pallas import tpu as pltpu

LN_EPS = 1e-5


def global_context_kernel(x_ref, kw_ref, w1_ref, b1_ref,
                          gamma_ref, beta_ref, w2_ref, b2_ref,
                          out_ref, pool_ref):
    # x_ref:    (TB, C, S)  input tile (native dtype, streamed once)
    # kw_ref:   (1, C)      key-conv weight (lane-dense, same dtype as x)
    # w1_ref:   (C, M)      conv1 weight^T (same dtype as x)
    # b1/gamma/beta:(1, M)  f32
    # w2_ref:   (M, O)      conv2 weight^T (same dtype as x)
    # b2_ref:   (1, O)      f32
    # out_ref:  (TB, O)     f32 output tile
    # pool_ref: (TB, C)     f32 scratch for the attention-pooled features
    tb = x_ref.shape[0]
    kw = kw_ref[...]                                   # (1, C), hoisted

    # Per-item logits + pooling.  Small static unroll: only one item's (C, S)
    # slab is live at a time (no full-tile value load, no f32 tile copy).
    for b in range(tb):
        xb = x_ref[b]                                  # (C, S), native dtype
        # 1x1 "key" conv -> spatial logits on the MXU (contract C).
        # Key bias omitted: constant over the softmax axis, cancels exactly.
        logit = lax.dot_general(kw, xb, (((1,), (0,)), ((), ())),
                                preferred_element_type=jnp.float32)   # (1, S)
        # Softmax over spatial positions; normalization fused after pooling.
        m = jnp.max(logit, axis=-1, keepdims=True)                    # (1, 1)
        e = jnp.exp(logit - m)                                        # (1, S)
        denom = jnp.sum(e, axis=-1, keepdims=True)                    # (1, 1)
        # Attention pooling: (1, S) x (C, S) contracting S -> (1, C) on MXU.
        pool_u = lax.dot_general(e.astype(xb.dtype), xb,
                                 (((1,), (1,)), ((), ())),
                                 preferred_element_type=jnp.float32)  # (1, C)
        # Exact reciprocal: one scalar per item, keeps f32 parity with ref.
        pool_ref[pl.ds(b, 1), :] = pool_u * pl.reciprocal(denom, approx=False)

    pool = pool_ref[...]                               # (TB, C) f32

    # 1x1 conv (C -> M) on the pooled 1x1 feature == dense layer.
    hidden = jnp.dot(pool.astype(w1_ref.dtype), w1_ref[...],
                     preferred_element_type=jnp.float32) + b1_ref[...]

    # LayerNorm over the M channel axis (normalized_shape == (M, 1, 1)).
    mu = jnp.mean(hidden, axis=-1, keepdims=True)
    var = jnp.mean((hidden - mu) ** 2, axis=-1, keepdims=True)
    hn = (hidden - mu) * lax.rsqrt(var + LN_EPS)
    hn = hn * gamma_ref[...] + beta_ref[...]

    # ReLU
    h = jnp.maximum(hn, 0.0)

    # 1x1 conv (M -> O) == dense layer.
    out = jnp.dot(h.astype(w2_ref.dtype), w2_ref[...],
                  preferred_element_type=jnp.float32) + b2_ref[...]
    out_ref[...] = out.astype(out_ref.dtype)


def _tpu_topology():
    """(physical VMEM bytes per TensorCore, # TensorCores sharing the grid)."""
    vmem = 128 * 1024 * 1024
    cores = 1
    try:
        info = pltpu.get_tpu_info()
        for attr in ("vmem_capacity_bytes", "vmem_bytes", "vmem_size_bytes"):
            v = getattr(info, attr, None)
            if v:
                vmem = int(v)
                break
    except Exception:
        pass
    try:
        kind = jax.devices()[0].device_kind.lower()
        if "v7" in kind:
            cores = 2          # v7x: 2 TensorCores per chip, 64 MiB VMEM each
    except Exception:
        pass
    return vmem, cores


def _pick_batch_tile(B, fit_cap, num_cores, max_unroll):
    """Largest divisor of B that fits the VMEM budget and the static-unroll
    cap.  On multi-TensorCore chips prefer tiles whose grid length divides
    evenly across cores so megacore sharding stays balanced."""
    cap = max(1, min(int(fit_cap), int(max_unroll)))
    divisors = [d for d in range(1, B + 1) if B % d == 0 and d <= cap]
    if num_cores > 1 and B >= 2 * num_cores:
        balanced = [d for d in divisors if (B // d) % num_cores == 0]
        if balanced:
            return max(balanced)
    return max(divisors)


def global_context(x, params, *, max_batch_unroll=8, vmem_limit_bytes=None):
    """x: (B, C, H, W) NCHW. Returns (B, O, 1, 1) like the PyTorch module."""
    kw, kb, w1t, b1, gamma, beta, w2t, b2 = params
    del kb  # constant bias before a softmax is a mathematical no-op
    B, C, H, W = x.shape
    S = H * W
    M = w1t.shape[1]
    O = w2t.shape[1]
    xf = x.reshape(B, C, S)

    # MXU operands must share a dtype with x; casting also halves weight VMEM
    # for bf16 models.  Biases / LayerNorm affine stay f32 (post-accum adds).
    cdt = xf.dtype
    kw = kw.astype(cdt)
    w1t = w1t.astype(cdt)
    w2t = w2t.astype(cdt)

    # Generation-aware VMEM budgeting (v5e/v6e: 128 MiB, v7x: 64 MiB per TC).
    vmem_phys, num_cores = _tpu_topology()
    if vmem_limit_bytes is None:
        vmem_limit_bytes = min(int(0.75 * vmem_phys), 96 * 1024 * 1024)

    itemsize = xf.dtype.itemsize
    w_itemsize = jnp.dtype(cdt).itemsize
    per_item = C * S * itemsize
    # Fixed VMEM: double-buffered weight blocks, f32 biases/affine, one item's
    # working slab + softmax temporaries, scratch/output + headroom.
    fixed = (2 * (C + C * M + M * O) * w_itemsize
             + 2 * (3 * M + O) * 4
             + per_item + 8 * S * 4
             + 2 * 1024 * 1024)
    budget = max(per_item, int(vmem_limit_bytes) - fixed)
    tb_fit = max(1, budget // (2 * per_item))   # 2x: double-buffered x tile
    tb = _pick_batch_tile(B, tb_fit, num_cores, max_batch_unroll)
    grid = (B // tb,)
    # TODO(synk): for very large C*S (e.g. C=2048, S~3136 on v7x's 64 MiB
    # VMEM) add an S-tiling grid axis with an online-softmax accumulator
    # instead of requiring a full (C, S) slab per step.

    cost = pl.CostEstimate(
        flops=int(4 * B * C * S + 2 * B * C * M + 2 * B * M * O),
        transcendentals=int(B * S),
        bytes_accessed=int(xf.size * itemsize
                           + (C + C * M + M * O) * w_itemsize
                           + (3 * M + O) * 4
                           + B * O * 4),
    )

    out = pl.pallas_call(
        global_context_kernel,
        out_shape=jax.ShapeDtypeStruct((B, O), jnp.float32),
        grid_spec=pltpu.PrefetchScalarGridSpec(
            num_scalar_prefetch=0,
            grid=grid,
            in_specs=[
                pl.BlockSpec((tb, C, S), lambda b: (b, 0, 0)),   # x tile
                pl.BlockSpec((1, C), lambda b: (0, 0)),          # key weight
                pl.BlockSpec((C, M), lambda b: (0, 0)),          # conv1 weight^T
                pl.BlockSpec((1, M), lambda b: (0, 0)),          # conv1 bias
                pl.BlockSpec((1, M), lambda b: (0, 0)),          # LN gamma
                pl.BlockSpec((1, M), lambda b: (0, 0)),          # LN beta
                pl.BlockSpec((M, O), lambda b: (0, 0)),          # conv2 weight^T
                pl.BlockSpec((1, O), lambda b: (0, 0)),          # conv2 bias
            ],
            out_specs=pl.BlockSpec((tb, O), lambda b: (b, 0)),
            scratch_shapes=[pltpu.VMEM((tb, C), jnp.float32)],
        ),
        compiler_params=pltpu.CompilerParams(
            dimension_semantics=("parallel",),
            vmem_limit_bytes=int(vmem_limit_bytes)),
        cost_estimate=cost,
    )(xf, kw, w1t, b1, gamma, beta, w2t, b2)

    return out.reshape(B, O, 1, 1)


def make_params(key, in_channel, out_channel, ratio=0.25):
    """Deterministic synthetic parameters mirroring the PyTorch module shapes."""
    mid = max(1, int(in_channel * ratio))
    ks = jax.random.split(key, 6)
    # key conv: weight (1, C, 1, 1), bias (1,)  -> stored lane-dense as (1, C)
    kw = 0.1 * jax.random.normal(ks[0], (1, in_channel), jnp.float32)
    kb = 0.1 * jax.random.normal(ks[1], (1, 1), jnp.float32)
    # layers[0] conv: weight (M, C, 1, 1), bias (M,)  -> store transposed (C, M)
    w1t = 0.1 * jax.random.normal(ks[2], (in_channel, mid), jnp.float32)
    b1 = 0.1 * jax.random.normal(ks[3], (1, mid), jnp.float32)
    # LayerNorm((M, 1, 1)): affine init gamma=1, beta=0
    gamma = jnp.ones((1, mid), jnp.float32)
    beta = jnp.zeros((1, mid), jnp.float32)
    # layers[3] conv: weight (O, M, 1, 1), bias (O,)  -> store transposed (M, O)
    w2t = 0.1 * jax.random.normal(ks[4], (mid, out_channel), jnp.float32)
    b2 = 0.1 * jax.random.normal(ks[5], (1, out_channel), jnp.float32)
    return (kw, kb, w1t, b1, gamma, beta, w2t, b2)


def reference(x, params):
    """Pure-JAX reference of the PyTorch forward (includes the key bias)."""
    kw, kb, w1t, b1, gamma, beta, w2t, b2 = params
    B, C, H, W = x.shape
    xf = x.reshape(B, C, H * W).astype(jnp.float32)
    logit = jnp.einsum("c,bcs->bs", kw[0], xf) + kb[0, 0]
    attn = jax.nn.softmax(logit, axis=-1)
    pool = jnp.einsum("bcs,bs->bc", xf, attn)
    hidden = pool @ w1t + b1
    mu = hidden.mean(-1, keepdims=True)
    var = ((hidden - mu) ** 2).mean(-1, keepdims=True)
    hn = (hidden - mu) / jnp.sqrt(var + LN_EPS) * gamma + beta
    h = jnp.maximum(hn, 0.0)
    out = h @ w2t + b2
    return out.reshape(B, -1, 1, 1)


if __name__ == "__main__":
    B, C, H, W = 2, 16, 16, 16
    out_channel = 8

    key = jax.random.PRNGKey(0)
    kx, kp = jax.random.split(key)
    x = jax.random.normal(kx, (B, C, H, W), jnp.float32)
    params = make_params(kp, C, out_channel, ratio=0.25)

    out = global_context(x, params)
    out = jax.block_until_ready(out)

    ref = reference(x, params)
    assert out.shape == (B, out_channel, 1, 1)
    assert jnp.allclose(out, ref, atol=1e-4, rtol=1e-4), "mismatch vs reference"

    print("KERNEL_OK")
</pallas_src>

<mosaic_0001>
module attributes {stable_mosaic.version = 11 : i64} {
  func.func @global_context_kernel(%arg0: i32, %arg1: memref<2x16x256xf32, #tpu.memory_space<vmem>>, %arg2: memref<1x16xf32, #tpu.memory_space<vmem>>, %arg3: memref<16x4xf32, #tpu.memory_space<vmem>>, %arg4: memref<1x4xf32, #tpu.memory_space<vmem>>, %arg5: memref<1x4xf32, #tpu.memory_space<vmem>>, %arg6: memref<1x4xf32, #tpu.memory_space<vmem>>, %arg7: memref<4x8xf32, #tpu.memory_space<vmem>>, %arg8: memref<1x8xf32, #tpu.memory_space<vmem>>, %arg9: memref<2x8xf32, #tpu.memory_space<vmem>>, %arg10: memref<2x16xf32, #tpu.memory_space<vmem>>) attributes {dimension_semantics = [#tpu.dimension_semantics<parallel>], iteration_bounds = array<i64: 1>, scalar_prefetch = 0 : i64, scratch_operands = 1 : i64, tpu.core_type = #tpu.core_type<tc>, window_params = [{transform_indices = @transform_0, window_bounds = array<i64: 2, 16, 256>}, {pipeline_mode = #tpu.pipeline_mode<synchronous>, transform_indices = @transform_1, window_bounds = array<i64: 1, 16>}, {pipeline_mode = #tpu.pipeline_mode<synchronous>, transform_indices = @transform_2, window_bounds = array<i64: 16, 4>}, {pipeline_mode = #tpu.pipeline_mode<synchronous>, transform_indices = @transform_3, window_bounds = array<i64: 1, 4>}, {pipeline_mode = #tpu.pipeline_mode<synchronous>, transform_indices = @transform_4, window_bounds = array<i64: 1, 4>}, {pipeline_mode = #tpu.pipeline_mode<synchronous>, transform_indices = @transform_5, window_bounds = array<i64: 1, 4>}, {pipeline_mode = #tpu.pipeline_mode<synchronous>, transform_indices = @transform_6, window_bounds = array<i64: 4, 8>}, {pipeline_mode = #tpu.pipeline_mode<synchronous>, transform_indices = @transform_7, window_bounds = array<i64: 1, 8>}, {transform_indices = @transform_8, window_bounds = array<i64: 2, 8>}]} {
    %c0 = arith.constant 0 : index
    %c0_0 = arith.constant 0 : index
    %0 = vector.load %arg2[%c0, %c0_0] : memref<1x16xf32, #tpu.memory_space<vmem>>, vector<1x16xf32>
    %c0_1 = arith.constant 0 : index
    %c0_2 = arith.constant 0 : index
    %c0_3 = arith.constant 0 : index
    %1 = vector.load %arg1[%c0_1, %c0_2, %c0_3] : memref<2x16x256xf32, #tpu.memory_space<vmem>>, vector<1x16x256xf32>
    %2 = vector.shape_cast %1 : vector<1x16x256xf32> to vector<16x256xf32>
    %cst = arith.constant dense<0.000000e+00> : vector<1x256xf32>
    %3 = tpu.matmul %0, %2, %cst {dimension_numbers = #tpu.dot_dimension_numbers<[1], [0], [0], [1], [0, 0, 1, 1], [], []>} : vector<1x16xf32>, vector<16x256xf32>, vector<1x256xf32> -> vector<1x256xf32>
    %cst_4 = arith.constant dense<0xFF800000> : vector<1xf32>
    %4 = vector.multi_reduction <maximumf>, %3, %cst_4 [1] : vector<1x256xf32> to vector<1xf32>
    %5 = vector.shape_cast %4 : vector<1xf32> to vector<1x1xf32>
    %6 = vector.broadcast %5 : vector<1x1xf32> to vector<1x256xf32>
    %7 = arith.subf %3, %6 : vector<1x256xf32>
    %8 = math.exp %7 : vector<1x256xf32>
    %cst_5 = arith.constant dense<0.000000e+00> : vector<1xf32>
    %9 = vector.multi_reduction <add>, %8, %cst_5 [1] : vector<1x256xf32> to vector<1xf32>
    %10 = vector.shape_cast %9 : vector<1xf32> to vector<1x1xf32>
    %cst_6 = arith.constant dense<0.000000e+00> : vector<1x16xf32>
    %11 = tpu.matmul %8, %2, %cst_6 {dimension_numbers = #tpu.dot_dimension_numbers<[1], [1], [0], [0], [0, 0, 1, 0], [], []>} : vector<1x256xf32>, vector<16x256xf32>, vector<1x16xf32> -> vector<1x16xf32>
    %12 = tpu.reciprocal %10 : vector<1x1xf32> -> vector<1x1xf32>
    %13 = vector.broadcast %12 : vector<1x1xf32> to vector<1x16xf32>
    %14 = arith.mulf %11, %13 : vector<1x16xf32>
    %c0_7 = arith.constant 0 : index
    %c0_8 = arith.constant 0 : index
    %15 = vector.load %arg10[%c0_7, %c0_8] : memref<2x16xf32, #tpu.memory_space<vmem>>, vector<1x16xf32>
    tpu.vector_store %arg10[%c0_7, %c0_8], %14 {strides = array<i32>} : memref<2x16xf32, #tpu.memory_space<vmem>>, vector<1x16xf32>,
    %c1 = arith.constant 1 : index
    %c0_9 = arith.constant 0 : index
    %c0_10 = arith.constant 0 : index
    %16 = vector.load %arg1[%c1, %c0_9, %c0_10] : memref<2x16x256xf32, #tpu.memory_space<vmem>>, vector<1x16x256xf32>
    %17 = vector.shape_cast %16 : vector<1x16x256xf32> to vector<16x256xf32>
    %cst_11 = arith.constant dense<0.000000e+00> : vector<1x256xf32>
    %18 = tpu.matmul %0, %17, %cst_11 {dimension_numbers = #tpu.dot_dimension_numbers<[1], [0], [0], [1], [0, 0, 1, 1], [], []>} : vector<1x16xf32>, vector<16x256xf32>, vector<1x256xf32> -> vector<1x256xf32>
    %cst_12 = arith.constant dense<0xFF800000> : vector<1xf32>
    %19 = vector.multi_reduction <maximumf>, %18, %cst_12 [1] : vector<1x256xf32> to vector<1xf32>
    %20 = vector.shape_cast %19 : vector<1xf32> to vector<1x1xf32>
    %21 = vector.broadcast %20 : vector<1x1xf32> to vector<1x256xf32>
    %22 = arith.subf %18, %21 : vector<1x256xf32>
    %23 = math.exp %22 : vector<1x256xf32>
    %cst_13 = arith.constant dense<0.000000e+00> : vector<1xf32>
    %24 = vector.multi_reduction <add>, %23, %cst_13 [1] : vector<1x256xf32> to vector<1xf32>
    %25 = vector.shape_cast %24 : vector<1xf32> to vector<1x1xf32>
    %cst_14 = arith.constant dense<0.000000e+00> : vector<1x16xf32>
    %26 = tpu.matmul %23, %17, %cst_14 {dimension_numbers = #tpu.dot_dimension_numbers<[1], [1], [0], [0], [0, 0, 1, 0], [], []>} : vector<1x256xf32>, vector<16x256xf32>, vector<1x16xf32> -> vector<1x16xf32>
    %27 = tpu.reciprocal %25 : vector<1x1xf32> -> vector<1x1xf32>
    %28 = vector.broadcast %27 : vector<1x1xf32> to vector<1x16xf32>
    %29 = arith.mulf %26, %28 : vector<1x16xf32>
    %c1_15 = arith.constant 1 : index
    %c0_16 = arith.constant 0 : index
    %30 = vector.load %arg10[%c1_15, %c0_16] : memref<2x16xf32, #tpu.memory_space<vmem>>, vector<1x16xf32>
    tpu.vector_store %arg10[%c1_15, %c0_16], %29 {strides = array<i32>} : memref<2x16xf32, #tpu.memory_space<vmem>>, vector<1x16xf32>,
    %c0_17 = arith.constant 0 : index
    %c0_18 = arith.constant 0 : index
    %31 = vector.load %arg10[%c0_17, %c0_18] : memref<2x16xf32, #tpu.memory_space<vmem>>, vector<2x16xf32>
    %c0_19 = arith.constant 0 : index
    %c0_20 = arith.constant 0 : index
    %32 = vector.load %arg3[%c0_19, %c0_20] : memref<16x4xf32, #tpu.memory_space<vmem>>, vector<16x4xf32>
    %cst_21 = arith.constant dense<0.000000e+00> : vector<2x4xf32>
    %33 = tpu.matmul %31, %32, %cst_21 {dimension_numbers = #tpu.dot_dimension_numbers<[1], [0], [0], [1], [0, 0, 1, 1], [], []>} : vector<2x16xf32>, vector<16x4xf32>, vector<2x4xf32> -> vector<2x4xf32>
    %c0_22 = arith.constant 0 : index
    %c0_23 = arith.constant 0 : index
    %34 = vector.load %arg4[%c0_22, %c0_23] : memref<1x4xf32, #tpu.memory_space<vmem>>, vector<1x4xf32>
    %35 = vector.broadcast %34 : vector<1x4xf32> to vector<2x4xf32>
    %36 = arith.addf %33, %35 : vector<2x4xf32>
    %cst_24 = arith.constant dense<0.000000e+00> : vector<2xf32>
    %37 = vector.multi_reduction <add>, %36, %cst_24 [1] : vector<2x4xf32> to vector<2xf32>
    %38 = vector.shape_cast %37 : vector<2xf32> to vector<2x1xf32>
    %cst_25 = arith.constant 4.000000e+00 : f32
    %39 = vector.broadcast %cst_25 : f32 to vector<2x1xf32>
    %40 = arith.divf %38, %39 : vector<2x1xf32>
    %41 = vector.broadcast %40 : vector<2x1xf32> to vector<2x4xf32>
    %42 = arith.subf %36, %41 : vector<2x4xf32>
    %43 = arith.mulf %42, %42 : vector<2x4xf32>
    %cst_26 = arith.constant dense<0.000000e+00> : vector<2xf32>
    %44 = vector.multi_reduction <add>, %43, %cst_26 [1] : vector<2x4xf32> to vector<2xf32>
    %45 = vector.shape_cast %44 : vector<2xf32> to vector<2x1xf32>
    %cst_27 = arith.constant 4.000000e+00 : f32
    %46 = vector.broadcast %cst_27 : f32 to vector<2x1xf32>
    %47 = arith.divf %45, %46 : vector<2x1xf32>
    %48 = vector.broadcast %40 : vector<2x1xf32> to vector<2x4xf32>
    %49 = arith.subf %36, %48 : vector<2x4xf32>
    %cst_28 = arith.constant 9.99999974E-6 : f32
    %50 = vector.broadcast %cst_28 : f32 to vector<2x1xf32>
    %51 = arith.addf %47, %50 : vector<2x1xf32>
    %52 = math.rsqrt %51 : vector<2x1xf32>
    %53 = vector.broadcast %52 : vector<2x1xf32> to vector<2x4xf32>
    %54 = arith.mulf %49, %53 : vector<2x4xf32>
    %c0_29 = arith.constant 0 : index
    %c0_30 = arith.constant 0 : index
    %55 = vector.load %arg5[%c0_29, %c0_30] : memref<1x4xf32, #tpu.memory_space<vmem>>, vector<1x4xf32>
    %56 = vector.broadcast %55 : vector<1x4xf32> to vector<2x4xf32>
    %57 = arith.mulf %54, %56 : vector<2x4xf32>
    %c0_31 = arith.constant 0 : index
    %c0_32 = arith.constant 0 : index
    %58 = vector.load %arg6[%c0_31, %c0_32] : memref<1x4xf32, #tpu.memory_space<vmem>>, vector<1x4xf32>
    %59 = vector.broadcast %58 : vector<1x4xf32> to vector<2x4xf32>
    %60 = arith.addf %57, %59 : vector<2x4xf32>
    %cst_33 = arith.constant 0.000000e+00 : f32
    %61 = vector.broadcast %cst_33 : f32 to vector<2x4xf32>
    %62 = arith.maximumf %60, %61 : vector<2x4xf32>
    %c0_34 = arith.constant 0 : index
    %c0_35 = arith.constant 0 : index
    %63 = vector.load %arg7[%c0_34, %c0_35] : memref<4x8xf32, #tpu.memory_space<vmem>>, vector<4x8xf32>
    %cst_36 = arith.constant dense<0.000000e+00> : vector<2x8xf32>
    %64 = tpu.matmul %62, %63, %cst_36 {dimension_numbers = #tpu.dot_dimension_numbers<[1], [0], [0], [1], [0, 0, 1, 1], [], []>} : vector<2x4xf32>, vector<4x8xf32>, vector<2x8xf32> -> vector<2x8xf32>
    %c0_37 = arith.constant 0 : index
    %c0_38 = arith.constant 0 : index
    %65 = vector.load %arg8[%c0_37, %c0_38] : memref<1x8xf32, #tpu.memory_space<vmem>>, vector<1x8xf32>
    %66 = vector.broadcast %65 : vector<1x8xf32> to vector<2x8xf32>
    %67 = arith.addf %64, %66 : vector<2x8xf32>
    %c0_39 = arith.constant 0 : index
    %c0_40 = arith.constant 0 : index
    %68 = vector.load %arg9[%c0_39, %c0_40] : memref<2x8xf32, #tpu.memory_space<vmem>>, vector<2x8xf32>
    tpu.vector_store %arg9[%c0_39, %c0_40], %67 {strides = array<i32>} : memref<2x8xf32, #tpu.memory_space<vmem>>, vector<2x8xf32>,
    return
  }
  func.func @transform_0(%arg0: i32) -> (i32, i32, i32) {
    %c0_i32 = arith.constant 0 : i32
    %c0_i32_0 = arith.constant 0 : i32
    %c0_i32_1 = arith.constant 0 : i32
    return %arg0, %c0_i32, %c0_i32_0 : i32, i32, i32
  }
  func.func @transform_1(%arg0: i32) -> (i32, i32) {
    %c0_i32 = arith.constant 0 : i32
    %c0_i32_0 = arith.constant 0 : i32
    %c0_i32_1 = arith.constant 0 : i32
    return %c0_i32, %c0_i32_0 : i32, i32
  }
  func.func @transform_2(%arg0: i32) -> (i32, i32) {
    %c0_i32 = arith.constant 0 : i32
    %c0_i32_0 = arith.constant 0 : i32
    %c0_i32_1 = arith.constant 0 : i32
    return %c0_i32, %c0_i32_0 : i32, i32
  }
  func.func @transform_3(%arg0: i32) -> (i32, i32) {
    %c0_i32 = arith.constant 0 : i32
    %c0_i32_0 = arith.constant 0 : i32
    %c0_i32_1 = arith.constant 0 : i32
    return %c0_i32, %c0_i32_0 : i32, i32
  }
  func.func @transform_4(%arg0: i32) -> (i32, i32) {
    %c0_i32 = arith.constant 0 : i32
    %c0_i32_0 = arith.constant 0 : i32
    %c0_i32_1 = arith.constant 0 : i32
    return %c0_i32, %c0_i32_0 : i32, i32
  }
  func.func @transform_5(%arg0: i32) -> (i32, i32) {
    %c0_i32 = arith.constant 0 : i32
    %c0_i32_0 = arith.constant 0 : i32
    %c0_i32_1 = arith.constant 0 : i32
    return %c0_i32, %c0_i32_0 : i32, i32
  }
  func.func @transform_6(%arg0: i32) -> (i32, i32) {
    %c0_i32 = arith.constant 0 : i32
    %c0_i32_0 = arith.constant 0 : i32
    %c0_i32_1 = arith.constant 0 : i32
    return %c0_i32, %c0_i32_0 : i32, i32
  }
  func.func @transform_7(%arg0: i32) -> (i32, i32) {
    %c0_i32 = arith.constant 0 : i32
    %c0_i32_0 = arith.constant 0 : i32
    %c0_i32_1 = arith.constant 0 : i32
    return %c0_i32, %c0_i32_0 : i32, i32
  }
  func.func @transform_8(%arg0: i32) -> (i32, i32) {
    %c0_i32 = arith.constant 0 : i32
    %c0_i32_0 = arith.constant 0 : i32
    return %arg0, %c0_i32 : i32, i32
  }
}

</mosaic_0001>

<llo_original>
// kernel: tpu_custom_call.1
$region0: #{tpu_custom_call.1}
  #allocation0 [shape = 'u32[]', space=smem, size = 0x4, offset = 0x4, fixed_abs, tag = 'smem constant byte address 0x4 - core index']
  #allocation1 [shape = 'u32[144,128]{1,0:T(1,128)}', space=vmem, size = 0x12000, scoped, tag = 'internal scratch']
  #allocation2 [shape = 'f32[2,16]{1,0:T(2,128)}', space=vmem, size = 0x400, scoped, tag = 'scratch operand']
  %s0 = inlined_call_operand.hbm [shape: f32[2,16,256], index: 0, kind: input, shape index: {}]
  %s1 = inlined_call_operand.hbm [shape: f32[1,16], index: 1, kind: input, shape index: {}]
  %s2 = inlined_call_operand.hbm [shape: f32[16,4], index: 2, kind: input, shape index: {}]
  %s3 = inlined_call_operand.hbm [shape: f32[1,4], index: 3, kind: input, shape index: {}]
  %s4 = inlined_call_operand.hbm [shape: f32[1,4], index: 4, kind: input, shape index: {}]
  %s5 = inlined_call_operand.hbm [shape: f32[1,4], index: 5, kind: input, shape index: {}]
  %s6 = inlined_call_operand.hbm [shape: f32[4,8], index: 6, kind: input, shape index: {}]
  %s7 = inlined_call_operand.hbm [shape: f32[1,8], index: 7, kind: input, shape index: {}]
  %s8 = inlined_call_operand.hbm [shape: f32[2,8], index: 8, kind: output, shape index: {}]
  %s9 = sld [smem:[#allocation0]]
  $region74: #{tpu_custom_call.1} parent=0
    _
  %s11 = ssub.s32 1, %s9
  %s12 = scalar_select 0, %s11, %s9
  $region1: #{tpu_custom_call.1} parent=0
    #allocation3 [shape = 'u8[32768]{0}', space=vmem, size = 0x8000, scoped, tag = 'input window, operand 0, single buffered']
    #allocation4 [shape = 's32[1]{0}', space=sflag, size = 0x4, scoped, tag = 'scoped memory for tpu_custom_call.1']
    #allocation5 [shape = 's32[1]{0}', space=sflag, size = 0x4, scoped, tag = 'scoped memory for tpu_custom_call.1']
    #allocation6 [shape = 'u8[512]{0}', space=vmem, size = 0x400, scoped, tag = 'input window, operand 1, single buffered']
    #allocation7 [shape = 's32[1]{0}', space=sflag, size = 0x4, scoped, tag = 'scoped memory for tpu_custom_call.1']
    #allocation8 [shape = 'u8[8192]{0}', space=vmem, size = 0x2000, scoped, tag = 'input window, operand 2, single buffered']
    #allocation9 [shape = 'u8[512]{0}', space=vmem, size = 0x400, scoped, tag = 'input window, operand 3, single buffered']
    #allocation10 [shape = 's32[1]{0}', space=sflag, size = 0x4, scoped, tag = 'scoped memory for tpu_custom_call.1']
    #allocation11 [shape = 'u8[512]{0}', space=vmem, size = 0x400, scoped, tag = 'input window, operand 4, single buffered']
    #allocation12 [shape = 'u8[512]{0}', space=vmem, size = 0x400, scoped, tag = 'input window, operand 5, single buffered']
    #allocation13 [shape = 's32[1]{0}', space=sflag, size = 0x4, scoped, tag = 'scoped memory for tpu_custom_call.1']
    #allocation14 [shape = 'u8[2048]{0}', space=vmem, size = 0x800, scoped, tag = 'input window, operand 6, single buffered']
    #allocation15 [shape = 'u8[512]{0}', space=vmem, size = 0x400, scoped, tag = 'input window, operand 7, single buffered']
    #allocation16 [shape = 's32[1]{0}', space=sflag, size = 0x4, scoped, tag = 'scoped memory for tpu_custom_call.1']
    #allocation17 [shape = 'u8[1024]{0}', space=vmem, size = 0x400, scoped, tag = 'output window, operand 0, single buffered']
    %13 = vsyncpa [#allocation4], 0
    %14 = vsyncpa [#allocation7], 0
    %15 = vsyncpa [#allocation10], 0
    %16 = vsyncpa [#allocation13], 0
    %17 = vsyncpa [#allocation16], 0
    %18 = vsyncpa [#allocation5], 0
    // Predicated region
    $region2: #{tpu_custom_call.1} parent=1 // pred_check
      _
    $region3: #{tpu_custom_call.1} parent=1 // pred_check_branch
      %20 = sbr.rel (0) target = $region5
    $region4: #{tpu_custom_call.1} parent=1 // pred_region
      %s22 = ssub.s32 1024, 1024
      %23 = vsyncadd [#allocation4], %s22
      %s24 = sshll.u32 [#allocation3], 4
      %s25 = int_to_ptr.vmem [resolvable:$true] %s24
      %30 = dma.hbm_to_vmem [thread:$0]  %s0, 1024, %s25, [#allocation4], 256, 256, 16
    $region5: #{tpu_custom_call.1} parent=1 // pred_fallthru
      _
    // Predicated region
    $region6: #{tpu_custom_call.1} parent=1 // pred_check
      _
    $region7: #{tpu_custom_call.1} parent=1 // pred_check_branch
      %32 = sbr.rel (0) target = $region9
    $region8: #{tpu_custom_call.1} parent=1 // pred_region
      %s34 = ssub.s32 16, 16
      %35 = vsyncadd [#allocation7], %s34
      %s37 = sshll.u32 [#allocation6], 4
      %s38 = int_to_ptr.vmem [resolvable:$true] %s37
      %40 = dma.hbm_to_vmem [thread:$0]  %s1, 16, %s38, [#allocation7]
    $region9: #{tpu_custom_call.1} parent=1 // pred_fallthru
      _
    // Predicated region
    $region10: #{tpu_custom_call.1} parent=1 // pred_check
      _
    $region11: #{tpu_custom_call.1} parent=1 // pred_check_branch
      %42 = sbr.rel (0) target = $region13
    $region12: #{tpu_custom_call.1} parent=1 // pred_region
      %s44 = ssub.s32 256, 256
      %45 = vsyncadd [#allocation7], %s44
      %s46 = sshll.u32 [#allocation8], 4
      %s47 = int_to_ptr.vmem [resolvable:$true] %s46
      %52 = dma.hbm_to_vmem [thread:$0]  %s2, 256, %s47, [#allocation7], 128, 128, 8
    $region13: #{tpu_custom_call.1} parent=1 // pred_fallthru
      _
    // Predicated region
    $region14: #{tpu_custom_call.1} parent=1 // pred_check
      _
    $region15: #{tpu_custom_call.1} parent=1 // pred_check_branch
      %54 = sbr.rel (0) target = $region17
    $region16: #{tpu_custom_call.1} parent=1 // pred_region
      %s56 = ssub.s32 16, 16
      %57 = vsyncadd [#allocation10], %s56
      %s59 = sshll.u32 [#allocation9], 4
      %s60 = int_to_ptr.vmem [resolvable:$true] %s59
      %62 = dma.hbm_to_vmem [thread:$0]  %s3, 16, %s60, [#allocation10]
    $region17: #{tpu_custom_call.1} parent=1 // pred_fallthru
      _
    // Predicated region
    $region18: #{tpu_custom_call.1} parent=1 // pred_check
      _
    $region19: #{tpu_custom_call.1} parent=1 // pred_check_branch
      %64 = sbr.rel (0) target = $region21
    $region20: #{tpu_custom_call.1} parent=1 // pred_region
      %s66 = ssub.s32 16, 16
      %67 = vsyncadd [#allocation10], %s66
      %s69 = sshll.u32 [#allocation11], 4
      %s70 = int_to_ptr.vmem [resolvable:$true] %s69
      %72 = dma.hbm_to_vmem [thread:$0]  %s4, 16, %s70, [#allocation10]
    $region21: #{tpu_custom_call.1} parent=1 // pred_fallthru
      _
    // Predicated region
    $region22: #{tpu_custom_call.1} parent=1 // pred_check
      _
    $region23: #{tpu_custom_call.1} parent=1 // pred_check_branch
      %74 = sbr.rel (0) target = $region25
    $region24: #{tpu_custom_call.1} parent=1 // pred_region
      %s76 = ssub.s32 16, 16
      %77 = vsyncadd [#allocation13], %s76
      %s79 = sshll.u32 [#allocation12], 4
      %s80 = int_to_ptr.vmem [resolvable:$true] %s79
      %82 = dma.hbm_to_vmem [thread:$0]  %s5, 16, %s80, [#allocation13]
    $region25: #{tpu_custom_call.1} parent=1 // pred_fallthru
      _
    // Predicated region
    $region26: #{tpu_custom_call.1} parent=1 // pred_check
      _
    $region27: #{tpu_custom_call.1} parent=1 // pred_check_branch
      %84 = sbr.rel (0) target = $region29
    $region28: #{tpu_custom_call.1} parent=1 // pred_region
      %s86 = ssub.s32 64, 64
      %87 = vsyncadd [#allocation13], %s86
      %s89 = sshll.u32 [#allocation14], 4
      %s90 = int_to_ptr.vmem [resolvable:$true] %s89
      %92 = dma.hbm_to_vmem [thread:$0]  %s6, 64, %s90, [#allocation13]
    $region29: #{tpu_custom_call.1} parent=1 // pred_fallthru
      _
    // Predicated region
    $region30: #{tpu_custom_call.1} parent=1 // pred_check
      _
    $region31: #{tpu_custom_call.1} parent=1 // pred_check_branch
      %94 = sbr.rel (0) target = $region33
    $region32: #{tpu_custom_call.1} parent=1 // pred_region
      %s96 = ssub.s32 16, 16
      %97 = vsyncadd [#allocation16], %s96
      %s99 = sshll.u32 [#allocation15], 4
      %s100 = int_to_ptr.vmem [resolvable:$true] %s99
      %102 = dma.hbm_to_vmem [thread:$0]  %s7, 16, %s100, [#allocation16]
    $region33: #{tpu_custom_call.1} parent=1 // pred_fallthru
      _
    // Predicated region
    $region34: #{tpu_custom_call.1} parent=1 // pred_check
      _
    $region35: #{tpu_custom_call.1} parent=1 // pred_check_branch
      %104 = sbr.rel (0) target = $region37
    $region36: #{tpu_custom_call.1} parent=1 // pred_region
      %105 = dma.done [#allocation4], 1024
    $region37: #{tpu_custom_call.1} parent=1 // pred_fallthru
      _
    // Predicated region
    $region38: #{tpu_custom_call.1} parent=1 // pred_check
      _
    $region39: #{tpu_custom_call.1} parent=1 // pred_check_branch
      %107 = sbr.rel (0) target = $region41
    $region40: #{tpu_custom_call.1} parent=1 // pred_region
      %108 = dma.done [#allocation7], 16
    $region41: #{tpu_custom_call.1} parent=1 // pred_fallthru
      _
    // Predicated region
    $region42: #{tpu_custom_call.1} parent=1 // pred_check
      _
    $region43: #{tpu_custom_call.1} parent=1 // pred_check_branch
      %110 = sbr.rel (0) target = $region45
    $region44: #{tpu_custom_call.1} parent=1 // pred_region
      %111 = dma.done [#allocation7], 256
    $region45: #{tpu_custom_call.1} parent=1 // pred_fallthru
      _
    // Predicated region
    $region46: #{tpu_custom_call.1} parent=1 // pred_check
      _
    $region47: #{tpu_custom_call.1} parent=1 // pred_check_branch
      %113 = sbr.rel (0) target = $region49
    $region48: #{tpu_custom_call.1} parent=1 // pred_region
      %114 = dma.done [#allocation10], 16
    $region49: #{tpu_custom_call.1} parent=1 // pred_fallthru
      _
    // Predicated region
    $region50: #{tpu_custom_call.1} parent=1 // pred_check
      _
    $region51: #{tpu_custom_call.1} parent=1 // pred_check_branch
      %116 = sbr.rel (0) target = $region53
    $region52: #{tpu_custom_call.1} parent=1 // pred_region
      %117 = dma.done [#allocation10], 16
    $region53: #{tpu_custom_call.1} parent=1 // pred_fallthru
      _
    // Predicated region
    $region54: #{tpu_custom_call.1} parent=1 // pred_check
      _
    $region55: #{tpu_custom_call.1} parent=1 // pred_check_branch
      %119 = sbr.rel (0) target = $region57
    $region56: #{tpu_custom_call.1} parent=1 // pred_region
      %120 = dma.done [#allocation13], 16
    $region57: #{tpu_custom_call.1} parent=1 // pred_fallthru
      _
    // Predicated region
    $region58: #{tpu_custom_call.1} parent=1 // pred_check
      _
    $region59: #{tpu_custom_call.1} parent=1 // pred_check_branch
      %122 = sbr.rel (0) target = $region61
    $region60: #{tpu_custom_call.1} parent=1 // pred_region
      %123 = dma.done [#allocation13], 64
    $region61: #{tpu_custom_call.1} parent=1 // pred_fallthru
      _
    // Predicated region
    $region62: #{tpu_custom_call.1} parent=1 // pred_check
      _
    $region63: #{tpu_custom_call.1} parent=1 // pred_check_branch
      %125 = sbr.rel (0) target = $region65
    $region64: #{tpu_custom_call.1} parent=1 // pred_region
      %126 = dma.done [#allocation16], 16
    $region65: #{tpu_custom_call.1} parent=1 // pred_fallthru
      _
    %v127 = vld [vmem:[#allocation6] sm:$0x1]
    %v128 = vld [vmem:[#allocation3] sm:$0xff]
    %v129 = vld [vmem:[#allocation3 + $0x8] sm:$0xff]
    %v130 = vld [vmem:[#allocation3 + $0x10] sm:$0xff]
    %v131 = vld [vmem:[#allocation3 + $0x18] sm:$0xff]
    %vm132 = vcmask 130048
    %v134 = vsel %vm132, %v127, 0
    %136 = vmatprep.subr.mxu0 %v129
    %137 = vmatpush1.msra.mxu0 %v128
    %138 = vmatprep.subr.mxu0 %v131
    %139 = vmatpush1.msra.mxu0 %v130
    %140 = vmatprep.subr.mxu0 0.0
    %141 = vmatpush1.msra.mxu0 0.0
    %142 = vmatprep.subr.mxu0 0.0
    %143 = vmatpush1.msra.mxu0 0.0
    %144 = vmatprep.subr.mxu0 0.0
    %145 = vmatpush1.msra.mxu0 0.0
    %146 = vmatprep.subr.mxu0 0.0
    %147 = vmatpush1.msra.mxu0 0.0
    %148 = vmatprep.subr.mxu0 0.0
    %149 = vmatpush1.msra.mxu0 0.0
    %150 = vmatprep.subr.mxu0 0.0
    %151 = vmatpush1.msra.mxu0 0.0
    %152 = vmatprep.subr.mxu0 0.0
    %153 = vmatpush1.msra.mxu0 0.0
    %154 = vmatprep.subr.mxu0 0.0
    %155 = vmatpush1.msra.mxu0 0.0
    %156 = vmatprep.subr.mxu0 0.0
    %157 = vmatpush1.msra.mxu0 0.0
    %158 = vmatprep.subr.mxu0 0.0
    %159 = vmatpush1.msra.mxu0 0.0
    %160 = vmatprep.subr.mxu0 0.0
    %161 = vmatpush1.msra.mxu0 0.0
    %162 = vmatprep.subr.mxu0 0.0
    %163 = vmatpush1.msra.mxu0 0.0
    %164 = vmatprep.subr.mxu0 0.0
    %165 = vmatpush1.msra.mxu0 0.0
    %166 = vmatprep.subr.mxu0 0.0
    %167 = vmatpush1.msra.mxu0 0.0
    %168 = vmatprep.subr.mxu0 0.0
    %169 = vmatpush1.msra.mxu0 0.0
    %170 = vmatprep.subr.mxu0 0.0
    %171 = vmatpush1.msra.mxu0 0.0
    %172 = vmatprep.subr.mxu0 0.0
    %173 = vmatpush1.msra.mxu0 0.0
    %174 = vmatprep.subr.mxu0 0.0
    %175 = vmatpush1.msra.mxu0 0.0
    %176 = vmatprep.subr.mxu0 0.0
    %177 = vmatpush1.msra.mxu0 0.0
    %178 = vmatprep.subr.mxu0 0.0
    %179 = vmatpush1.msra.mxu0 0.0
    %180 = vmatprep.subr.mxu0 0.0
    %181 = vmatpush1.msra.mxu0 0.0
    %182 = vmatprep.subr.mxu0 0.0
    %183 = vmatpush1.msra.mxu0 0.0
    %184 = vmatprep.subr.mxu0 0.0
    %185 = vmatpush1.msra.mxu0 0.0
    %186 = vmatprep.subr.mxu0 0.0
    %187 = vmatpush1.msra.mxu0 0.0
    %188 = vmatprep.subr.mxu0 0.0
    %189 = vmatpush1.msra.mxu0 0.0
    %190 = vmatprep.subr.mxu0 0.0
    %191 = vmatpush1.msra.mxu0 0.0
    %192 = vmatprep.subr.mxu0 0.0
    %193 = vmatpush1.msra.mxu0 0.0
    %194 = vmatprep.subr.mxu0 0.0
    %195 = vmatpush1.msra.mxu0 0.0
    %196 = vmatprep.subr.mxu0 0.0
    %197 = vmatpush1.msra.mxu0 0.0
    %198 = vmatprep.subr.mxu0 0.0
    %199 = vmatpush1.msra.mxu0 0.0
    %200 = vmatprep.mubr.f32.mxu0 0.0
    %201 = vmatmul.mubr.f32.gmra.mrb[0].mxu0 %v134
    %v202 = vpop.f32.mrb[0].mxu0
    %v203 = vadd.f32 0.0, %v202
    %v204 = vpop.f32.mrb[0].mxu0
    %v205 = vadd.f32 0.0, %v204
    %206 = vdwg.mxu0
    %vm207 = vcmask 1040384
    %v208 = vsel %vm207, %v203, -inf
    %v209 = vsel %vm207, %v205, -inf
    %v210 = vmax.f32 %v208, %v209
    %211 = vmax.xlane.f32.xlu0 %v210
    %v212 = vpop.xlane.xlu0 %211
    %v213 = vsub.f32 %v203, %v212
    %v214 = vsub.f32 %v205, %v212
    %v215 = vmul.f32 %v213, 1.442695
    %v216 = vpow.pop %v215
    %v217 = vmul.f32 %v214, 1.442695
    %v218 = vpow.pop %v217
    %v219 = vsel %vm207, %v216, 0.0
    %v220 = vsel %vm207, %v218, 0.0
    %v221 = vadd.f32 %v219, %v220
    %222 = vadd.xlane.f32.xlu0 %v221
    %v223 = vpop.xlane.xlu0 %222
    %224 = vmatprep.subr.mxu0 %v129
    %225 = vmatpush1.xpose.msra.mxu0 %v128
    %226 = vmatprep.subr.mxu0 %v131
    %227 = vmatpush1.xpose.msra.mxu0 %v130
    %228 = vmatprep.subr.mxu0 0.0
    %229 = vmatpush1.xpose.msra.mxu0 0.0
    %230 = vmatprep.subr.mxu0 0.0
    %231 = vmatpush1.xpose.msra.mxu0 0.0
    %232 = vmatprep.subr.mxu0 0.0
    %233 = vmatpush1.xpose.msra.mxu0 0.0
    %234 = vmatprep.subr.mxu0 0.0
    %235 = vmatpush1.xpose.msra.mxu0 0.0
    %236 = vmatprep.subr.mxu0 0.0
    %237 = vmatpush1.xpose.msra.mxu0 0.0
    %238 = vmatprep.subr.mxu0 0.0
    %239 = vmatpush1.xpose.msra.mxu0 0.0
    %240 = vmatprep.subr.mxu0 0.0
    %241 = vmatpush1.xpose.msra.mxu0 0.0
    %242 = vmatprep.subr.mxu0 0.0
    %243 = vmatpush1.xpose.msra.mxu0 0.0
    %244 = vmatprep.subr.mxu0 0.0
    %245 = vmatpush1.xpose.msra.mxu0 0.0
    %246 = vmatprep.subr.mxu0 0.0
    %247 = vmatpush1.xpose.msra.mxu0 0.0
    %248 = vmatprep.subr.mxu0 0.0
    %249 = vmatpush1.xpose.msra.mxu0 0.0
    %250 = vmatprep.subr.mxu0 0.0
    %251 = vmatpush1.xpose.msra.mxu0 0.0
    %252 = vmatprep.subr.mxu0 0.0
    %253 = vmatpush1.xpose.msra.mxu0 0.0
    %254 = vmatprep.subr.mxu0 0.0
    %255 = vmatpush1.xpose.msra.mxu0 0.0
    %256 = vmatprep.subr.mxu0 0.0
    %257 = vmatpush1.xpose.msra.mxu0 0.0
    %258 = vmatprep.subr.mxu0 0.0
    %259 = vmatpush1.xpose.msra.mxu0 0.0
    %260 = vmatprep.subr.mxu0 0.0
    %261 = vmatpush1.xpose.msra.mxu0 0.0
    %262 = vmatprep.subr.mxu0 0.0
    %263 = vmatpush1.xpose.msra.mxu0 0.0
    %264 = vmatprep.subr.mxu0 0.0
    %265 = vmatpush1.xpose.msra.mxu0 0.0
    %266 = vmatprep.subr.mxu0 0.0
    %267 = vmatpush1.xpose.msra.mxu0 0.0
    %268 = vmatprep.subr.mxu0 0.0
    %269 = vmatpush1.xpose.msra.mxu0 0.0
    %270 = vmatprep.subr.mxu0 0.0
    %271 = vmatpush1.xpose.msra.mxu0 0.0
    %272 = vmatprep.subr.mxu0 0.0
    %273 = vmatpush1.xpose.msra.mxu0 0.0
    %274 = vmatprep.subr.mxu0 0.0
    %275 = vmatpush1.xpose.msra.mxu0 0.0
    %276 = vmatprep.subr.mxu0 0.0
    %277 = vmatpush1.xpose.msra.mxu0 0.0
    %278 = vmatprep.subr.mxu0 0.0
    %279 = vmatpush1.xpose.msra.mxu0 0.0
    %280 = vmatprep.subr.mxu0 0.0
    %281 = vmatpush1.xpose.msra.mxu0 0.0
    %282 = vmatprep.subr.mxu0 0.0
    %283 = vmatpush1.xpose.msra.mxu0 0.0
    %284 = vmatprep.subr.mxu0 0.0
    %285 = vmatpush1.xpose.msra.mxu0 0.0
    %286 = vmatprep.subr.mxu0 0.0
    %287 = vmatpush1.xpose.msra.mxu0 0.0
    %288 = vmatprep.mubr.f32.mxu0 %v218
    %289 = vmatmul.mubr.f32.gmra.mrb[0].mxu0 %v216
    %v290 = vpop.f32.mrb[0].mxu0
    %v291 = vadd.f32 0.0, %v290
    %v292 = vpop.f32.mrb[0].mxu0
    %293 = vdwg.mxu0
    %v294 = vrcp.pop %v223
    %v295 = vmul.f32 %v291, %v294
    %vm296 = vcmask 122880
    %297 = vst.msk [vmem:[#allocation2] sm:$0x1] %vm296, %v295
    %s298 = scalar_lea.vmem [#allocation3], 32
    %v299 = vld [vmem:[%s298] sm:$0xff]
    %v300 = vld [vmem:[%s298 + $0x8] sm:$0xff]
    %v301 = vld [vmem:[%s298 + $0x10] sm:$0xff]
    %v302 = vld [vmem:[%s298 + $0x18] sm:$0xff]
    %303 = vmatprep.subr.mxu0 %v300
    %304 = vmatpush1.msra.mxu0 %v299
    %305 = vmatprep.subr.mxu0 %v302
    %306 = vmatpush1.msra.mxu0 %v301
    %307 = vmatprep.subr.mxu0 0.0
    %308 = vmatpush1.msra.mxu0 0.0
    %309 = vmatprep.subr.mxu0 0.0
    %310 = vmatpush1.msra.mxu0 0.0
    %311 = vmatprep.subr.mxu0 0.0
    %312 = vmatpush1.msra.mxu0 0.0
    %313 = vmatprep.subr.mxu0 0.0
    %314 = vmatpush1.msra.mxu0 0.0
    %315 = vmatprep.subr.mxu0 0.0
    %316 = vmatpush1.msra.mxu0 0.0
    %317 = vmatprep.subr.mxu0 0.0
    %318 = vmatpush1.msra.mxu0 0.0
    %319 = vmatprep.subr.mxu0 0.0
    %320 = vmatpush1.msra.mxu0 0.0
    %321 = vmatprep.subr.mxu0 0.0
    %322 = vmatpush1.msra.mxu0 0.0
    %323 = vmatprep.subr.mxu0 0.0
    %324 = vmatpush1.msra.mxu0 0.0
    %325 = vmatprep.subr.mxu0 0.0
    %326 = vmatpush1.msra.mxu0 0.0
    %327 = vmatprep.subr.mxu0 0.0
    %328 = vmatpush1.msra.mxu0 0.0
    %329 = vmatprep.subr.mxu0 0.0
    %330 = vmatpush1.msra.mxu0 0.0
    %331 = vmatprep.subr.mxu0 0.0
    %332 = vmatpush1.msra.mxu0 0.0
    %333 = vmatprep.subr.mxu0 0.0
    %334 = vmatpush1.msra.mxu0 0.0
    %335 = vmatprep.subr.mxu0 0.0
    %336 = vmatpush1.msra.mxu0 0.0
    %337 = vmatprep.subr.mxu0 0.0
    %338 = vmatpush1.msra.mxu0 0.0
    %339 = vmatprep.subr.mxu0 0.0
    %340 = vmatpush1.msra.mxu0 0.0
    %341 = vmatprep.subr.mxu0 0.0
    %342 = vmatpush1.msra.mxu0 0.0
    %343 = vmatprep.subr.mxu0 0.0
    %344 = vmatpush1.msra.mxu0 0.0
    %345 = vmatprep.subr.mxu0 0.0
    %346 = vmatpush1.msra.mxu0 0.0
    %347 = vmatprep.subr.mxu0 0.0
    %348 = vmatpush1.msra.mxu0 0.0
    %349 = vmatprep.subr.mxu0 0.0
    %350 = vmatpush1.msra.mxu0 0.0
    %351 = vmatprep.subr.mxu0 0.0
    %352 = vmatpush1.msra.mxu0 0.0
    %353 = vmatprep.subr.mxu0 0.0
    %354 = vmatpush1.msra.mxu0 0.0
    %355 = vmatprep.subr.mxu0 0.0
    %356 = vmatpush1.msra.mxu0 0.0
    %357 = vmatprep.subr.mxu0 0.0
    %358 = vmatpush1.msra.mxu0 0.0
    %359 = vmatprep.subr.mxu0 0.0
    %360 = vmatpush1.msra.mxu0 0.0
    %361 = vmatprep.subr.mxu0 0.0
    %362 = vmatpush1.msra.mxu0 0.0
    %363 = vmatprep.subr.mxu0 0.0
    %364 = vmatpush1.msra.mxu0 0.0
    %365 = vmatprep.subr.mxu0 0.0
    %366 = vmatpush1.msra.mxu0 0.0
    %367 = vmatprep.mubr.f32.mxu0 0.0
    %368 = vmatmul.mubr.f32.gmra.mrb[0].mxu0 %v134
    %v369 = vpop.f32.mrb[0].mxu0
    %v370 = vadd.f32 0.0, %v369
    %v371 = vpop.f32.mrb[0].mxu0
    %v372 = vadd.f32 0.0, %v371
    %373 = vdwg.mxu0
    %v374 = vsel %vm207, %v370, -inf
    %v375 = vsel %vm207, %v372, -inf
    %v376 = vmax.f32 %v374, %v375
    %377 = vmax.xlane.f32.xlu0 %v376
    %v378 = vpop.xlane.xlu0 %377
    %v379 = vsub.f32 %v370, %v378
    %v380 = vsub.f32 %v372, %v378
    %v381 = vmul.f32 %v379, 1.442695
    %v382 = vpow.pop %v381
    %v383 = vmul.f32 %v380, 1.442695
    %v384 = vpow.pop %v383
    %v385 = vsel %vm207, %v382, 0.0
    %v386 = vsel %vm207, %v384, 0.0
    %v387 = vadd.f32 %v385, %v386
    %388 = vadd.xlane.f32.xlu0 %v387
    %v389 = vpop.xlane.xlu0 %388
    %390 = vmatprep.subr.mxu0 %v300
    %391 = vmatpush1.xpose.msra.mxu0 %v299
    %392 = vmatprep.subr.mxu0 %v302
    %393 = vmatpush1.xpose.msra.mxu0 %v301
    %394 = vmatprep.subr.mxu0 0.0
    %395 = vmatpush1.xpose.msra.mxu0 0.0
    %396 = vmatprep.subr.mxu0 0.0
    %397 = vmatpush1.xpose.msra.mxu0 0.0
    %398 = vmatprep.subr.mxu0 0.0
    %399 = vmatpush1.xpose.msra.mxu0 0.0
    %400 = vmatprep.subr.mxu0 0.0
    %401 = vmatpush1.xpose.msra.mxu0 0.0
    %402 = vmatprep.subr.mxu0 0.0
    %403 = vmatpush1.xpose.msra.mxu0 0.0
    %404 = vmatprep.subr.mxu0 0.0
    %405 = vmatpush1.xpose.msra.mxu0 0.0
    %406 = vmatprep.subr.mxu0 0.0
    %407 = vmatpush1.xpose.msra.mxu0 0.0
    %408 = vmatprep.subr.mxu0 0.0
    %409 = vmatpush1.xpose.msra.mxu0 0.0
    %410 = vmatprep.subr.mxu0 0.0
    %411 = vmatpush1.xpose.msra.mxu0 0.0
    %412 = vmatprep.subr.mxu0 0.0
    %413 = vmatpush1.xpose.msra.mxu0 0.0
    %414 = vmatprep.subr.mxu0 0.0
    %415 = vmatpush1.xpose.msra.mxu0 0.0
    %416 = vmatprep.subr.mxu0 0.0
    %417 = vmatpush1.xpose.msra.mxu0 0.0
    %418 = vmatprep.subr.mxu0 0.0
    %419 = vmatpush1.xpose.msra.mxu0 0.0
    %420 = vmatprep.subr.mxu0 0.0
    %421 = vmatpush1.xpose.msra.mxu0 0.0
    %422 = vmatprep.subr.mxu0 0.0
    %423 = vmatpush1.xpose.msra.mxu0 0.0
    %424 = vmatprep.subr.mxu0 0.0
    %425 = vmatpush1.xpose.msra.mxu0 0.0
    %426 = vmatprep.subr.mxu0 0.0
    %427 = vmatpush1.xpose.msra.mxu0 0.0
    %428 = vmatprep.subr.mxu0 0.0
    %429 = vmatpush1.xpose.msra.mxu0 0.0
    %430 = vmatprep.subr.mxu0 0.0
    %431 = vmatpush1.xpose.msra.mxu0 0.0
    %432 = vmatprep.subr.mxu0 0.0
    %433 = vmatpush1.xpose.msra.mxu0 0.0
    %434 = vmatprep.subr.mxu0 0.0
    %435 = vmatpush1.xpose.msra.mxu0 0.0
    %436 = vmatprep.subr.mxu0 0.0
    %437 = vmatpush1.xpose.msra.mxu0 0.0
    %438 = vmatprep.subr.mxu0 0.0
    %439 = vmatpush1.xpose.msra.mxu0 0.0
    %440 = vmatprep.subr.mxu0 0.0
    %441 = vmatpush1.xpose.msra.mxu0 0.0
    %442 = vmatprep.subr.mxu0 0.0
    %443 = vmatpush1.xpose.msra.mxu0 0.0
    %444 = vmatprep.subr.mxu0 0.0
    %445 = vmatpush1.xpose.msra.mxu0 0.0
    %446 = vmatprep.subr.mxu0 0.0
    %447 = vmatpush1.xpose.msra.mxu0 0.0
    %448 = vmatprep.subr.mxu0 0.0
    %449 = vmatpush1.xpose.msra.mxu0 0.0
    %450 = vmatprep.subr.mxu0 0.0
    %451 = vmatpush1.xpose.msra.mxu0 0.0
    %452 = vmatprep.subr.mxu0 0.0
    %453 = vmatpush1.xpose.msra.mxu0 0.0
    %454 = vmatprep.mubr.f32.mxu0 %v384
    %455 = vmatmul.mubr.f32.gmra.mrb[0].mxu0 %v382
    %v456 = vpop.f32.mrb[0].mxu0
    %v457 = vadd.f32 0.0, %v456
    %v458 = vpop.f32.mrb[0].mxu0
    %459 = vdwg.mxu0
    %v460 = vrcp.pop %v389
    %v461 = vmul.f32 %v457, %v460
    %462 = vst.msk [vmem:[#allocation2 + $0x1] sm:$0x1] %vm296, %v461
    %v463 = vld [vmem:[#allocation2] sm:$0x3]
    %v464 = vld [vmem:[#allocation8] sm:$0xff]
    %v465 = vld [vmem:[#allocation8 + $0x8] sm:$0xff]
    %v466 = vld [vmem:[#allocation9] sm:$0x1]
    %v468 = vlaneseq
    %v469 = vshrl.u32 %v468, 7
    %v470 = vsub.s32 0, %v469
    %v471 = vrot.slane %v466, %v470
    %v474 = vsel %vm132, %v463, 0
    %476 = vmatprep.subr.mxu0 0.0
    %477 = vmatpush1.msra.mxu0 %v464
    %478 = vmatprep.subr.mxu0 0.0
    %479 = vmatpush1.msra.mxu0 %v465
    %480 = vmatprep.subr.mxu0 0.0
    %481 = vmatpush1.msra.mxu0 0.0
    %482 = vmatprep.subr.mxu0 0.0
    %483 = vmatpush1.msra.mxu0 0.0
    %484 = vmatprep.subr.mxu0 0.0
    %485 = vmatpush1.msra.mxu0 0.0
    %486 = vmatprep.subr.mxu0 0.0
    %487 = vmatpush1.msra.mxu0 0.0
    %488 = vmatprep.subr.mxu0 0.0
    %489 = vmatpush1.msra.mxu0 0.0
    %490 = vmatprep.subr.mxu0 0.0
    %491 = vmatpush1.msra.mxu0 0.0
    %492 = vmatprep.subr.mxu0 0.0
    %493 = vmatpush1.msra.mxu0 0.0
    %494 = vmatprep.subr.mxu0 0.0
    %495 = vmatpush1.msra.mxu0 0.0
    %496 = vmatprep.subr.mxu0 0.0
    %497 = vmatpush1.msra.mxu0 0.0
    %498 = vmatprep.subr.mxu0 0.0
    %499 = vmatpush1.msra.mxu0 0.0
    %500 = vmatprep.subr.mxu0 0.0
    %501 = vmatpush1.msra.mxu0 0.0
    %502 = vmatprep.subr.mxu0 0.0
    %503 = vmatpush1.msra.mxu0 0.0
    %504 = vmatprep.subr.mxu0 0.0
    %505 = vmatpush1.msra.mxu0 0.0
    %506 = vmatprep.subr.mxu0 0.0
    %507 = vmatpush1.msra.mxu0 0.0
    %508 = vmatprep.subr.mxu0 0.0
    %509 = vmatpush1.msra.mxu0 0.0
    %510 = vmatprep.subr.mxu0 0.0
    %511 = vmatpush1.msra.mxu0 0.0
    %512 = vmatprep.subr.mxu0 0.0
    %513 = vmatpush1.msra.mxu0 0.0
    %514 = vmatprep.subr.mxu0 0.0
    %515 = vmatpush1.msra.mxu0 0.0
    %516 = vmatprep.subr.mxu0 0.0
    %517 = vmatpush1.msra.mxu0 0.0
    %518 = vmatprep.subr.mxu0 0.0
    %519 = vmatpush1.msra.mxu0 0.0
    %520 = vmatprep.subr.mxu0 0.0
    %521 = vmatpush1.msra.mxu0 0.0
    %522 = vmatprep.subr.mxu0 0.0
    %523 = vmatpush1.msra.mxu0 0.0
    %524 = vmatprep.subr.mxu0 0.0
    %525 = vmatpush1.msra.mxu0 0.0
    %526 = vmatprep.subr.mxu0 0.0
    %527 = vmatpush1.msra.mxu0 0.0
    %528 = vmatprep.subr.mxu0 0.0
    %529 = vmatpush1.msra.mxu0 0.0
    %530 = vmatprep.subr.mxu0 0.0
    %531 = vmatpush1.msra.mxu0 0.0
    %532 = vmatprep.subr.mxu0 0.0
    %533 = vmatpush1.msra.mxu0 0.0
    %534 = vmatprep.subr.mxu0 0.0
    %535 = vmatpush1.msra.mxu0 0.0
    %536 = vmatprep.subr.mxu0 0.0
    %537 = vmatpush1.msra.mxu0 0.0
    %538 = vmatprep.subr.mxu0 0.0
    %539 = vmatpush1.msra.mxu0 0.0
    %540 = vmatprep.mubr.f32.mxu0 0.0
    %541 = vmatmul.mubr.f32.gmra.mrb[0].mxu0 %v474
    %v542 = vpop.f32.mrb[0].mxu0
    %v543 = vadd.f32 %v471, %v542
    %v544 = vpop.f32.mrb[0].mxu0
    %545 = vdwg.mxu0
    %vm546 = vcmask 25600
    %v547 = vsel %vm546, %v543, 0.0
    %548 = vadd.xlane.f32.xlu0 %v547
    %v549 = vpop.xlane.xlu0 %548
    %v550 = vrcp.pop 4.0
    %v551 = vmul.f32 %v549, %v550
    %v552 = vsub.f32 %v543, %v551
    %v553 = vmul.f32 %v552, %v552
    %v554 = vsel %vm546, %v553, 0.0
    %555 = vadd.xlane.f32.xlu0 %v554
    %v556 = vpop.xlane.xlu0 %555
    %v557 = vmul.f32 %v556, %v550
    %v558 = vadd.f32 %v557, 1e-05
    %v559 = vrsqrt.pop %v558
    %v560 = vmul.f32 %v552, %v559
    %v561 = vld [vmem:[#allocation11] sm:$0x1]
    %v563 = vlaneseq
    %v564 = vshrl.u32 %v563, 7
    %v565 = vsub.s32 0, %v564
    %v566 = vrot.slane %v561, %v565
    %v568 = vmul.f32 %v560, %v566
    %v569 = vld [vmem:[#allocation12] sm:$0x1]
    %v571 = vlaneseq
    %v572 = vshrl.u32 %v571, 7
    %v573 = vsub.s32 0, %v572
    %v574 = vrot.slane %v569, %v573
    %v576 = vadd.f32 %v568, %v574
    %v577 = vmax.f32 %v576, 0.0
    %v578 = vld [vmem:[#allocation14] sm:$0xf]
    %v579 = vld [vmem:[#allocation15] sm:$0x1]
    %v581 = vlaneseq
    %v582 = vshrl.u32 %v581, 7
    %v583 = vsub.s32 0, %v582
    %v584 = vrot.slane %v579, %v583
    %vm586 = vcmask 31744
    %v588 = vsel %vm586, %v577, 0
    %vm590 = vcmask 1043456
    %v592 = vsel %vm590, %v578, 0
    %594 = vmatprep.subr.mxu0 0.0
    %595 = vmatpush1.msra.mxu0 %v592
    %596 = vmatprep.subr.mxu0 0.0
    %597 = vmatpush1.msra.mxu0 0.0
    %598 = vmatprep.subr.mxu0 0.0
    %599 = vmatpush1.msra.mxu0 0.0
    %600 = vmatprep.subr.mxu0 0.0
    %601 = vmatpush1.msra.mxu0 0.0
    %602 = vmatprep.subr.mxu0 0.0
    %603 = vmatpush1.msra.mxu0 0.0
    %604 = vmatprep.subr.mxu0 0.0
    %605 = vmatpush1.msra.mxu0 0.0
    %606 = vmatprep.subr.mxu0 0.0
    %607 = vmatpush1.msra.mxu0 0.0
    %608 = vmatprep.subr.mxu0 0.0
    %609 = vmatpush1.msra.mxu0 0.0
    %610 = vmatprep.subr.mxu0 0.0
    %611 = vmatpush1.msra.mxu0 0.0
    %612 = vmatprep.subr.mxu0 0.0
    %613 = vmatpush1.msra.mxu0 0.0
    %614 = vmatprep.subr.mxu0 0.0
    %615 = vmatpush1.msra.mxu0 0.0
    %616 = vmatprep.subr.mxu0 0.0
    %617 = vmatpush1.msra.mxu0 0.0
    %618 = vmatprep.subr.mxu0 0.0
    %619 = vmatpush1.msra.mxu0 0.0
    %620 = vmatprep.subr.mxu0 0.0
    %621 = vmatpush1.msra.mxu0 0.0
    %622 = vmatprep.subr.mxu0 0.0
    %623 = vmatpush1.msra.mxu0 0.0
    %624 = vmatprep.subr.mxu0 0.0
    %625 = vmatpush1.msra.mxu0 0.0
    %626 = vmatprep.subr.mxu0 0.0
    %627 = vmatpush1.msra.mxu0 0.0
    %628 = vmatprep.subr.mxu0 0.0
    %629 = vmatpush1.msra.mxu0 0.0
    %630 = vmatprep.subr.mxu0 0.0
    %631 = vmatpush1.msra.mxu0 0.0
    %632 = vmatprep.subr.mxu0 0.0
    %633 = vmatpush1.msra.mxu0 0.0
    %634 = vmatprep.subr.mxu0 0.0
    %635 = vmatpush1.msra.mxu0 0.0
    %636 = vmatprep.subr.mxu0 0.0
    %637 = vmatpush1.msra.mxu0 0.0
    %638 = vmatprep.subr.mxu0 0.0
    %639 = vmatpush1.msra.mxu0 0.0
    %640 = vmatprep.subr.mxu0 0.0
    %641 = vmatpush1.msra.mxu0 0.0
    %642 = vmatprep.subr.mxu0 0.0
    %643 = vmatpush1.msra.mxu0 0.0
    %644 = vmatprep.subr.mxu0 0.0
    %645 = vmatpush1.msra.mxu0 0.0
    %646 = vmatprep.subr.mxu0 0.0
    %647 = vmatpush1.msra.mxu0 0.0
    %648 = vmatprep.subr.mxu0 0.0
    %649 = vmatpush1.msra.mxu0 0.0
    %650 = vmatprep.subr.mxu0 0.0
    %651 = vmatpush1.msra.mxu0 0.0
    %652 = vmatprep.subr.mxu0 0.0
    %653 = vmatpush1.msra.mxu0 0.0
    %654 = vmatprep.subr.mxu0 0.0
    %655 = vmatpush1.msra.mxu0 0.0
    %656 = vmatprep.subr.mxu0 0.0
    %657 = vmatpush1.msra.mxu0 0.0
    %658 = vmatprep.mubr.f32.mxu0 0.0
    %659 = vmatmul.mubr.f32.gmra.mrb[0].mxu0 %v588
    %v660 = vpop.f32.mrb[0].mxu0
    %v661 = vadd.f32 %v584, %v660
    %v662 = vpop.f32.mrb[0].mxu0
    %663 = vdwg.mxu0
    %vm664 = vcmask 58368
    %665 = vst.msk [vmem:[#allocation17] sm:$0x3] %vm664, %v661
    // Predicated region
    $region66: #{tpu_custom_call.1} parent=1 // pred_check
      _
    $region67: #{tpu_custom_call.1} parent=1 // pred_check_branch
      %667 = sbr.rel (0) target = $region69
    $region68: #{tpu_custom_call.1} parent=1 // pred_region
      %s669 = ssub.s32 32, 32
      %670 = vsyncadd [#allocation5], %s669
      %s672 = sshll.u32 [#allocation17], 4
      %s673 = int_to_ptr.vmem [resolvable:$true] %s672
      %675 = dma.vmem_to_hbm [thread:$0]  %s673, 32, %s8, [#allocation5]
    $region69: #{tpu_custom_call.1} parent=1 // pred_fallthru
      _
    // Predicated region
    $region70: #{tpu_custom_call.1} parent=1 // pred_check
      _
    $region71: #{tpu_custom_call.1} parent=1 // pred_check_branch
      %677 = sbr.rel (0) target = $region73
    $region72: #{tpu_custom_call.1} parent=1 // pred_region
      %678 = dma.done [#allocation5], 32
    $region73: #{tpu_custom_call.1} parent=1 // pred_fallthru
      _
    %679 = vsyncpa [#allocation4], 1
    %680 = vsyncpa [#allocation7], 1
    %681 = vsyncpa [#allocation10], 1
    %682 = vsyncpa [#allocation13], 1
    %683 = vsyncpa [#allocation16], 1
    %684 = vsyncpa [#allocation5], 1

</llo_original>
